<compile_context>
chip_gen: v7x
topology: tpu7x:2x2x1
jax: 0.10.0
libtpu: 0.0.40
codegen_flags: <defaults>
</compile_context>

<pallas_src>
import math
import jax
import jax.numpy as jnp
from jax.experimental import pallas as pl
from jax.experimental.pallas import tpu as pltpu

# ------------------------- config -------------------------
NUM_COLS = [0, 1, 2, 3]
CATEGORIES = [3, 5]
D_EMBEDDING = 8
D = 32
D_HIDDEN_FACTOR = 2.0
N_LAYERS = 2
D_OUT = 1
BATCH = 16
EPS = 1e-5

D_NUMERICAL = len(NUM_COLS)
D_HIDDEN = int(D * D_HIDDEN_FACTOR)                       # 64
D_IN = D_NUMERICAL + len(CATEGORIES) * D_EMBEDDING        # 20
INPUT_DIM = D_NUMERICAL + len(CATEGORIES)                 # 6
CAT_COLS = [i for i in range(INPUT_DIM) if i not in NUM_COLS]
N_CAT = len(CATEGORIES)
TOTAL_CATS = sum(CATEGORIES)                              # 8
CAT_OFFSETS_PY = [0]
for _c in CATEGORIES[:-1]:
    CAT_OFFSETS_PY.append(CAT_OFFSETS_PY[-1] + _c)        # [0, 3]

K_FIRST = ((INPUT_DIM + TOTAL_CATS + 7) // 8) * 8         # 16: fused first-layer K
D_OUT_PAD = 128                                           # lane-dense head output
assert 2 * D_HIDDEN == D_OUT_PAD   # lets the w0 stack and the padded head share a slab

# Row layout of the packed bias / layernorm vector slab (width D_OUT_PAD).
ROW_BF = 0
ROW_B0 = 1                      # + layer
ROW_B1 = ROW_B0 + N_LAYERS      # + layer
ROW_LNW = ROW_B1 + N_LAYERS     # + layer
ROW_LNB = ROW_LNW + N_LAYERS    # + layer
ROW_LNLW = ROW_LNB + N_LAYERS
ROW_LNLB = ROW_LNLW + 1
ROW_BH = ROW_LNLB + 1
N_VEC_ROWS = ROW_BH + 1         # 12


# ------------------------- kernel -------------------------
def resnet_kernel(x_ref, wfirst_ref, w0wh_ref, w1s_ref, vecs_ref, o_ref):
    x = x_ref[...]                      # (B, INPUT_DIM) f32 (cat indices as floats)
    vecs = vecs_ref[...]                # (N_VEC_ROWS, 128) f32
    B = x.shape[0]

    def layernorm(v, w, b):
        # var = E[v^2] - mu^2: the two cross-lane reductions are independent.
        mu = jnp.mean(v, axis=-1, keepdims=True)
        ms = jnp.mean(v * v, axis=-1, keepdims=True)
        inv = jax.lax.rsqrt(ms - mu * mu + EPS)
        return (v - mu) * inv * w + b

    # ---- fused first layer: [x_all | multihot(cat) | 0] @ W_first + bf ----
    # One-hot row-select == embedding lookup, pre-folded into W_first; the raw
    # categorical-index columns of x_all hit zero weight rows; category offsets
    # are baked in as Python constants.
    iota = jax.lax.broadcasted_iota(jnp.int32, (B, TOTAL_CATS), 1)
    mh = jnp.zeros((B, TOTAL_CATS), jnp.float32)
    for col, off in zip(CAT_COLS, CAT_OFFSETS_PY):
        gidx = x[:, col:col + 1].astype(jnp.int32) + off
        mh = mh + (gidx == iota).astype(jnp.float32)
    parts = [x, mh]
    if K_FIRST > INPUT_DIM + TOTAL_CATS:
        parts.append(jnp.zeros((B, K_FIRST - INPUT_DIM - TOTAL_CATS), jnp.float32))
    xk = jnp.concatenate(parts, axis=-1)                          # (B, K_FIRST)
    h = (jnp.dot(xk, wfirst_ref[...], preferred_element_type=jnp.float32)
         + vecs[ROW_BF:ROW_BF + 1, :D])

    # ---- residual blocks (static unroll; n_layers is tiny) ----
    for l in range(N_LAYERS):
        z = layernorm(h,
                      vecs[ROW_LNW + l:ROW_LNW + l + 1, :D],
                      vecs[ROW_LNB + l:ROW_LNB + l + 1, :D])
        u = (jnp.dot(z, w0wh_ref[l], preferred_element_type=jnp.float32)
             + vecs[ROW_B0 + l:ROW_B0 + l + 1, :])                # (B,128) = [a | g]
        g = pltpu.roll(u, shift=D_HIDDEN, axis=1)                 # [g | a] (XLU, free)
        zz = u * jnp.maximum(g, 0.0)                              # cols :64 = reglu
        # zero rows 64.. of w1s kill the junk half -> no lane split needed
        z2 = (jnp.dot(zz, w1s_ref[l], preferred_element_type=jnp.float32)
              + vecs[ROW_B1 + l:ROW_B1 + l + 1, :D])
        h = h + z2

    # ---- last norm + relu + head (padded to 128 lane-dense output columns) ----
    h = layernorm(h, vecs[ROW_LNLW:ROW_LNLW + 1, :D],
                  vecs[ROW_LNLB:ROW_LNLB + 1, :D])
    h = jnp.maximum(h, 0.0)                                       # last_activation
    out = (jnp.dot(h, w0wh_ref[N_LAYERS], preferred_element_type=jnp.float32)
           + vecs[ROW_BH:ROW_BH + 1, :])
    o_ref[...] = out.astype(o_ref.dtype)


# ------------------------- wrapper -------------------------
@jax.jit
def resnet_forward(x_all, kp):
    """Full forward under one jit: one no-grid pallas_call (whole arrays in VMEM)."""
    B = x_all.shape[0]
    out = pl.pallas_call(
        resnet_kernel,
        out_shape=jax.ShapeDtypeStruct((B, D_OUT_PAD), jnp.float32),
    )(x_all.astype(jnp.float32), kp["w_first"], kp["w0_wh"], kp["w1s"], kp["vecs"])
    return out[:, 0]                       # un-pad head + x.squeeze(-1)


# ------------------------- params -------------------------
def _linear(key, fan_in, fan_out):
    kw, kb = jax.random.split(key)
    bound = 1.0 / math.sqrt(fan_in)
    w = jax.random.uniform(kw, (fan_in, fan_out), jnp.float32, -bound, bound)
    b = jax.random.uniform(kb, (fan_out,), jnp.float32, -bound, bound)
    return w, b


def make_params(key):
    keys = jax.random.split(key, 4 + 2 * N_LAYERS)
    ki = iter(keys)
    emb_table = jax.random.normal(next(ki), (TOTAL_CATS, D_EMBEDDING),
                                  jnp.float32) * 0.1
    wf, bf = _linear(next(ki), D_IN, D)
    w0, b0, w1, b1, lnw, lnb = ([] for _ in range(6))
    for _ in range(N_LAYERS):
        w0_l, b0_l = _linear(next(ki), D, 2 * D_HIDDEN)
        w1_l, b1_l = _linear(next(ki), D_HIDDEN, D)
        w0.append(w0_l); b0.append(b0_l)
        w1.append(w1_l); b1.append(b1_l)
        lnw.append(jnp.ones((D,), jnp.float32))
        lnb.append(jnp.zeros((D,), jnp.float32))
    wh, bh = _linear(next(ki), D, D_OUT)
    return {
        "emb_table": emb_table, "wf": wf, "bf": bf,
        "w0": jnp.stack(w0), "b0": jnp.stack(b0),
        "w1": jnp.stack(w1), "b1": jnp.stack(b1),
        "lnw": jnp.stack(lnw), "lnb": jnp.stack(lnb),
        "lnl_w": jnp.ones((D,), jnp.float32),
        "lnl_b": jnp.zeros((D,), jnp.float32),
        "wh": wh, "bh": bh,
    }


def prepare_kernel_params(p):
    """One-time exact algebraic repack of weights into a few packed slabs."""
    wf = p["wf"]                                              # (D_IN, D)
    # Fused first-layer weight, rows aligned with the kernel's [x_all|multihot|0]:
    w_first = jnp.zeros((K_FIRST, D), jnp.float32)
    for j, col in enumerate(NUM_COLS):                        # numeric columns
        w_first = w_first.at[col].set(wf[j])
    # categorical groups folded through the embedding tables:
    # (onehot @ E_g) @ Wf_g == onehot @ (E_g @ Wf_g)
    for g, c in enumerate(CATEGORIES):
        off = CAT_OFFSETS_PY[g]
        e_g = p["emb_table"][off:off + c]                                  # (c, D_EMB)
        w_g = wf[D_NUMERICAL + g * D_EMBEDDING:
                 D_NUMERICAL + (g + 1) * D_EMBEDDING]                      # (D_EMB, D)
        w_first = w_first.at[INPUT_DIM + off:INPUT_DIM + off + c].set(e_g @ w_g)
    # (raw cat-index rows and zero-pad rows of w_first stay 0.)

    # w0 stack + lane-dense padded head share one (N_LAYERS+1, 32, 128) slab.
    wh_pad = jnp.zeros((D, D_OUT_PAD), jnp.float32).at[:, :D_OUT].set(p["wh"])
    w0_wh = jnp.concatenate([p["w0"], wh_pad[None]], axis=0)

    # w1 padded with zero rows 64..127 (kills the junk half of the rolled reglu).
    w1s = jnp.zeros((N_LAYERS, 2 * D_HIDDEN, D), jnp.float32)
    w1s = w1s.at[:, :D_HIDDEN, :].set(p["w1"])

    # All biases + layernorm vectors in one (12, 128) slab.
    vecs = jnp.zeros((N_VEC_ROWS, D_OUT_PAD), jnp.float32)
    vecs = vecs.at[ROW_BF, :D].set(p["bf"])
    for l in range(N_LAYERS):
        vecs = vecs.at[ROW_B0 + l, :].set(p["b0"][l])
        vecs = vecs.at[ROW_B1 + l, :D].set(p["b1"][l])
        vecs = vecs.at[ROW_LNW + l, :D].set(p["lnw"][l])
        vecs = vecs.at[ROW_LNB + l, :D].set(p["lnb"][l])
    vecs = vecs.at[ROW_LNLW, :D].set(p["lnl_w"])
    vecs = vecs.at[ROW_LNLB, :D].set(p["lnl_b"])
    vecs = vecs.at[ROW_BH, :D_OUT].set(p["bh"])

    return {"w_first": w_first, "w0_wh": w0_wh, "w1s": w1s, "vecs": vecs}


# ------------------------- reference (pure JAX, torch semantics) -------------------------
def reference_forward(x_all, p):
    x_num = x_all[:, jnp.array(NUM_COLS)]
    x_cat = x_all[:, jnp.array(CAT_COLS)].astype(jnp.int32)
    idx = x_cat + jnp.array(CAT_OFFSETS_PY, jnp.int32)[None, :]
    emb = jnp.take(p["emb_table"], idx, axis=0).reshape(x_all.shape[0], -1)
    h = jnp.concatenate([x_num, emb], axis=-1) @ p["wf"] + p["bf"]

    def ln(v, w, b):
        mu = jnp.mean(v, axis=-1, keepdims=True)
        var = jnp.mean((v - mu) ** 2, axis=-1, keepdims=True)   # biased, like torch
        return (v - mu) * jax.lax.rsqrt(var + EPS) * w + b

    for l in range(N_LAYERS):
        z = ln(h, p["lnw"][l], p["lnb"][l])
        u = z @ p["w0"][l] + p["b0"][l]
        a, g = u[:, :D_HIDDEN], u[:, D_HIDDEN:]
        z = a * jnp.maximum(g, 0.0)                             # reglu
        z = z @ p["w1"][l] + p["b1"][l]
        h = h + z
    h = jnp.maximum(ln(h, p["lnl_w"], p["lnl_b"]), 0.0)
    return (h @ p["wh"] + p["bh"]).squeeze(-1)


# ------------------------- main -------------------------
if __name__ == "__main__":
    key = jax.random.PRNGKey(0)
    k_num, k_cat, k_par = jax.random.split(key, 3)

    # x_all (BATCH, INPUT_DIM): numeric cols ~ N(0,1), categorical cols = indices
    x_num = jax.random.normal(k_num, (BATCH, D_NUMERICAL), jnp.float32)
    cat_cols = []
    k = k_cat
    for c in CATEGORIES:
        k, sub = jax.random.split(k)
        cat_cols.append(jax.random.randint(sub, (BATCH, 1), 0, c).astype(jnp.float32))
    x_all = jnp.concatenate([x_num] + cat_cols, axis=-1)        # shape (16, 6)

    params = make_params(k_par)
    kparams = prepare_kernel_params(params)

    out = jax.block_until_ready(resnet_forward(x_all, kparams))
    ref = reference_forward(x_all, params)

    assert out.shape == (BATCH,)
    assert jnp.allclose(out, ref, atol=1e-4, rtol=1e-4), "mismatch vs JAX reference"

    print("KERNEL_OK")
</pallas_src>

<mosaic_0001>
module attributes {stable_mosaic.version = 11 : i64} {
  func.func @resnet_kernel(%arg0: memref<16x6xf32, #tpu.memory_space<vmem>>, %arg1: memref<16x32xf32, #tpu.memory_space<vmem>>, %arg2: memref<3x32x128xf32, #tpu.memory_space<vmem>>, %arg3: memref<2x128x32xf32, #tpu.memory_space<vmem>>, %arg4: memref<12x128xf32, #tpu.memory_space<vmem>>, %arg5: memref<16x128xf32, #tpu.memory_space<vmem>>) attributes {dimension_semantics = [], scalar_prefetch = 0 : i64, scratch_operands = 0 : i64, tpu.core_type = #tpu.core_type<tc>} {
    %c0 = arith.constant 0 : index
    %c0_0 = arith.constant 0 : index
    %0 = vector.load %arg0[%c0, %c0_0] : memref<16x6xf32, #tpu.memory_space<vmem>>, vector<16x6xf32>
    %c0_1 = arith.constant 0 : index
    %c0_2 = arith.constant 0 : index
    %1 = vector.load %arg4[%c0_1, %c0_2] : memref<12x128xf32, #tpu.memory_space<vmem>>, vector<12x128xf32>
    %2 = tpu.iota {dimensions = array<i32: 1>} : vector<16x8xi32>
    %cst = arith.constant 0.000000e+00 : f32
    %3 = vector.broadcast %cst : f32 to vector<16x8xf32>
    %4 = vector.extract_strided_slice %0 {offsets = [0, 4], sizes = [16, 1], strides = [1, 1]} : vector<16x6xf32> to vector<16x1xf32>
    %5 = arith.fptosi %4 : vector<16x1xf32> to vector<16x1xi32>
    %c0_i32 = arith.constant 0 : i32
    %6 = vector.broadcast %c0_i32 : i32 to vector<16x1xi32>
    %7 = arith.addi %5, %6 : vector<16x1xi32>
    %8 = vector.broadcast %7 : vector<16x1xi32> to vector<16x8xi32>
    %9 = arith.cmpi eq, %8, %2 : vector<16x8xi32>
    %10 = arith.extui %9 : vector<16x8xi1> to vector<16x8xi32>
    %11 = arith.sitofp %10 : vector<16x8xi32> to vector<16x8xf32>
    %12 = arith.addf %3, %11 : vector<16x8xf32>
    %13 = vector.extract_strided_slice %0 {offsets = [0, 5], sizes = [16, 1], strides = [1, 1]} : vector<16x6xf32> to vector<16x1xf32>
    %14 = arith.fptosi %13 : vector<16x1xf32> to vector<16x1xi32>
    %c3_i32 = arith.constant 3 : i32
    %15 = vector.broadcast %c3_i32 : i32 to vector<16x1xi32>
    %16 = arith.addi %14, %15 : vector<16x1xi32>
    %17 = vector.broadcast %16 : vector<16x1xi32> to vector<16x8xi32>
    %18 = arith.cmpi eq, %17, %2 : vector<16x8xi32>
    %19 = arith.extui %18 : vector<16x8xi1> to vector<16x8xi32>
    %20 = arith.sitofp %19 : vector<16x8xi32> to vector<16x8xf32>
    %21 = arith.addf %12, %20 : vector<16x8xf32>
    %cst_3 = arith.constant 0.000000e+00 : f32
    %22 = vector.broadcast %cst_3 : f32 to vector<16x2xf32>
    %23 = tpu.concatenate %0, %21, %22 in 1 : vector<16x6xf32>, vector<16x8xf32>, vector<16x2xf32> -> vector<16x16xf32>
    %c0_4 = arith.constant 0 : index
    %c0_5 = arith.constant 0 : index
    %24 = vector.load %arg1[%c0_4, %c0_5] : memref<16x32xf32, #tpu.memory_space<vmem>>, vector<16x32xf32>
    %cst_6 = arith.constant dense<0.000000e+00> : vector<16x32xf32>
    %25 = tpu.matmul %23, %24, %cst_6 {dimension_numbers = #tpu.dot_dimension_numbers<[1], [0], [0], [1], [0, 0, 1, 1], [], []>} : vector<16x16xf32>, vector<16x32xf32>, vector<16x32xf32> -> vector<16x32xf32>
    %26 = vector.extract_strided_slice %1 {offsets = [0, 0], sizes = [1, 32], strides = [1, 1]} : vector<12x128xf32> to vector<1x32xf32>
    %27 = vector.broadcast %26 : vector<1x32xf32> to vector<16x32xf32>
    %28 = arith.addf %25, %27 : vector<16x32xf32>
    %29 = vector.extract_strided_slice %1 {offsets = [5, 0], sizes = [1, 32], strides = [1, 1]} : vector<12x128xf32> to vector<1x32xf32>
    %30 = vector.extract_strided_slice %1 {offsets = [7, 0], sizes = [1, 32], strides = [1, 1]} : vector<12x128xf32> to vector<1x32xf32>
    %cst_7 = arith.constant dense<0.000000e+00> : vector<16xf32>
    %31 = vector.multi_reduction <add>, %28, %cst_7 [1] : vector<16x32xf32> to vector<16xf32>
    %32 = vector.shape_cast %31 : vector<16xf32> to vector<16x1xf32>
    %cst_8 = arith.constant 3.200000e+01 : f32
    %33 = vector.broadcast %cst_8 : f32 to vector<16x1xf32>
    %34 = arith.divf %32, %33 : vector<16x1xf32>
    %35 = arith.mulf %28, %28 : vector<16x32xf32>
    %cst_9 = arith.constant dense<0.000000e+00> : vector<16xf32>
    %36 = vector.multi_reduction <add>, %35, %cst_9 [1] : vector<16x32xf32> to vector<16xf32>
    %37 = vector.shape_cast %36 : vector<16xf32> to vector<16x1xf32>
    %cst_10 = arith.constant 3.200000e+01 : f32
    %38 = vector.broadcast %cst_10 : f32 to vector<16x1xf32>
    %39 = arith.divf %37, %38 : vector<16x1xf32>
    %40 = arith.mulf %34, %34 : vector<16x1xf32>
    %41 = arith.subf %39, %40 : vector<16x1xf32>
    %cst_11 = arith.constant 9.99999974E-6 : f32
    %42 = vector.broadcast %cst_11 : f32 to vector<16x1xf32>
    %43 = arith.addf %41, %42 : vector<16x1xf32>
    %44 = math.rsqrt %43 : vector<16x1xf32>
    %45 = vector.broadcast %34 : vector<16x1xf32> to vector<16x32xf32>
    %46 = arith.subf %28, %45 : vector<16x32xf32>
    %47 = vector.broadcast %44 : vector<16x1xf32> to vector<16x32xf32>
    %48 = arith.mulf %46, %47 : vector<16x32xf32>
    %49 = vector.broadcast %29 : vector<1x32xf32> to vector<16x32xf32>
    %50 = arith.mulf %48, %49 : vector<16x32xf32>
    %51 = vector.broadcast %30 : vector<1x32xf32> to vector<16x32xf32>
    %52 = arith.addf %50, %51 : vector<16x32xf32>
    %c0_12 = arith.constant 0 : index
    %c0_13 = arith.constant 0 : index
    %c0_14 = arith.constant 0 : index
    %53 = vector.load %arg2[%c0_12, %c0_13, %c0_14] : memref<3x32x128xf32, #tpu.memory_space<vmem>>, vector<1x32x128xf32>
    %54 = vector.shape_cast %53 : vector<1x32x128xf32> to vector<32x128xf32>
    %cst_15 = arith.constant dense<0.000000e+00> : vector<16x128xf32>
    %55 = tpu.matmul %52, %54, %cst_15 {dimension_numbers = #tpu.dot_dimension_numbers<[1], [0], [0], [1], [0, 0, 1, 1], [], []>} : vector<16x32xf32>, vector<32x128xf32>, vector<16x128xf32> -> vector<16x128xf32>
    %56 = vector.extract_strided_slice %1 {offsets = [1, 0], sizes = [1, 128], strides = [1, 1]} : vector<12x128xf32> to vector<1x128xf32>
    %57 = vector.broadcast %56 : vector<1x128xf32> to vector<16x128xf32>
    %58 = arith.addf %55, %57 : vector<16x128xf32>
    %c64_i32 = arith.constant 64 : i32
    %59 = tpu.dynamic_rotate %58 by %c64_i32 dim 1 : vector<16x128xf32>, i32 -> vector<16x128xf32>
    %cst_16 = arith.constant 0.000000e+00 : f32
    %60 = vector.broadcast %cst_16 : f32 to vector<16x128xf32>
    %61 = arith.maximumf %59, %60 : vector<16x128xf32>
    %62 = arith.mulf %58, %61 : vector<16x128xf32>
    %c0_17 = arith.constant 0 : index
    %c0_18 = arith.constant 0 : index
    %c0_19 = arith.constant 0 : index
    %63 = vector.load %arg3[%c0_17, %c0_18, %c0_19] : memref<2x128x32xf32, #tpu.memory_space<vmem>>, vector<1x128x32xf32>
    %64 = vector.shape_cast %63 : vector<1x128x32xf32> to vector<128x32xf32>
    %cst_20 = arith.constant dense<0.000000e+00> : vector<16x32xf32>
    %65 = tpu.matmul %62, %64, %cst_20 {dimension_numbers = #tpu.dot_dimension_numbers<[1], [0], [0], [1], [0, 0, 1, 1], [], []>} : vector<16x128xf32>, vector<128x32xf32>, vector<16x32xf32> -> vector<16x32xf32>
    %66 = vector.extract_strided_slice %1 {offsets = [3, 0], sizes = [1, 32], strides = [1, 1]} : vector<12x128xf32> to vector<1x32xf32>
    %67 = vector.broadcast %66 : vector<1x32xf32> to vector<16x32xf32>
    %68 = arith.addf %65, %67 : vector<16x32xf32>
    %69 = arith.addf %28, %68 : vector<16x32xf32>
    %70 = vector.extract_strided_slice %1 {offsets = [6, 0], sizes = [1, 32], strides = [1, 1]} : vector<12x128xf32> to vector<1x32xf32>
    %71 = vector.extract_strided_slice %1 {offsets = [8, 0], sizes = [1, 32], strides = [1, 1]} : vector<12x128xf32> to vector<1x32xf32>
    %cst_21 = arith.constant dense<0.000000e+00> : vector<16xf32>
    %72 = vector.multi_reduction <add>, %69, %cst_21 [1] : vector<16x32xf32> to vector<16xf32>
    %73 = vector.shape_cast %72 : vector<16xf32> to vector<16x1xf32>
    %cst_22 = arith.constant 3.200000e+01 : f32
    %74 = vector.broadcast %cst_22 : f32 to vector<16x1xf32>
    %75 = arith.divf %73, %74 : vector<16x1xf32>
    %76 = arith.mulf %69, %69 : vector<16x32xf32>
    %cst_23 = arith.constant dense<0.000000e+00> : vector<16xf32>
    %77 = vector.multi_reduction <add>, %76, %cst_23 [1] : vector<16x32xf32> to vector<16xf32>
    %78 = vector.shape_cast %77 : vector<16xf32> to vector<16x1xf32>
    %cst_24 = arith.constant 3.200000e+01 : f32
    %79 = vector.broadcast %cst_24 : f32 to vector<16x1xf32>
    %80 = arith.divf %78, %79 : vector<16x1xf32>
    %81 = arith.mulf %75, %75 : vector<16x1xf32>
    %82 = arith.subf %80, %81 : vector<16x1xf32>
    %cst_25 = arith.constant 9.99999974E-6 : f32
    %83 = vector.broadcast %cst_25 : f32 to vector<16x1xf32>
    %84 = arith.addf %82, %83 : vector<16x1xf32>
    %85 = math.rsqrt %84 : vector<16x1xf32>
    %86 = vector.broadcast %75 : vector<16x1xf32> to vector<16x32xf32>
    %87 = arith.subf %69, %86 : vector<16x32xf32>
    %88 = vector.broadcast %85 : vector<16x1xf32> to vector<16x32xf32>
    %89 = arith.mulf %87, %88 : vector<16x32xf32>
    %90 = vector.broadcast %70 : vector<1x32xf32> to vector<16x32xf32>
    %91 = arith.mulf %89, %90 : vector<16x32xf32>
    %92 = vector.broadcast %71 : vector<1x32xf32> to vector<16x32xf32>
    %93 = arith.addf %91, %92 : vector<16x32xf32>
    %c1 = arith.constant 1 : index
    %c0_26 = arith.constant 0 : index
    %c0_27 = arith.constant 0 : index
    %94 = vector.load %arg2[%c1, %c0_26, %c0_27] : memref<3x32x128xf32, #tpu.memory_space<vmem>>, vector<1x32x128xf32>
    %95 = vector.shape_cast %94 : vector<1x32x128xf32> to vector<32x128xf32>
    %cst_28 = arith.constant dense<0.000000e+00> : vector<16x128xf32>
    %96 = tpu.matmul %93, %95, %cst_28 {dimension_numbers = #tpu.dot_dimension_numbers<[1], [0], [0], [1], [0, 0, 1, 1], [], []>} : vector<16x32xf32>, vector<32x128xf32>, vector<16x128xf32> -> vector<16x128xf32>
    %97 = vector.extract_strided_slice %1 {offsets = [2, 0], sizes = [1, 128], strides = [1, 1]} : vector<12x128xf32> to vector<1x128xf32>
    %98 = vector.broadcast %97 : vector<1x128xf32> to vector<16x128xf32>
    %99 = arith.addf %96, %98 : vector<16x128xf32>
    %c64_i32_29 = arith.constant 64 : i32
    %100 = tpu.dynamic_rotate %99 by %c64_i32_29 dim 1 : vector<16x128xf32>, i32 -> vector<16x128xf32>
    %cst_30 = arith.constant 0.000000e+00 : f32
    %101 = vector.broadcast %cst_30 : f32 to vector<16x128xf32>
    %102 = arith.maximumf %100, %101 : vector<16x128xf32>
    %103 = arith.mulf %99, %102 : vector<16x128xf32>
    %c1_31 = arith.constant 1 : index
    %c0_32 = arith.constant 0 : index
    %c0_33 = arith.constant 0 : index
    %104 = vector.load %arg3[%c1_31, %c0_32, %c0_33] : memref<2x128x32xf32, #tpu.memory_space<vmem>>, vector<1x128x32xf32>
    %105 = vector.shape_cast %104 : vector<1x128x32xf32> to vector<128x32xf32>
    %cst_34 = arith.constant dense<0.000000e+00> : vector<16x32xf32>
    %106 = tpu.matmul %103, %105, %cst_34 {dimension_numbers = #tpu.dot_dimension_numbers<[1], [0], [0], [1], [0, 0, 1, 1], [], []>} : vector<16x128xf32>, vector<128x32xf32>, vector<16x32xf32> -> vector<16x32xf32>
    %107 = vector.extract_strided_slice %1 {offsets = [4, 0], sizes = [1, 32], strides = [1, 1]} : vector<12x128xf32> to vector<1x32xf32>
    %108 = vector.broadcast %107 : vector<1x32xf32> to vector<16x32xf32>
    %109 = arith.addf %106, %108 : vector<16x32xf32>
    %110 = arith.addf %69, %109 : vector<16x32xf32>
    %111 = vector.extract_strided_slice %1 {offsets = [9, 0], sizes = [1, 32], strides = [1, 1]} : vector<12x128xf32> to vector<1x32xf32>
    %112 = vector.extract_strided_slice %1 {offsets = [10, 0], sizes = [1, 32], strides = [1, 1]} : vector<12x128xf32> to vector<1x32xf32>
    %cst_35 = arith.constant dense<0.000000e+00> : vector<16xf32>
    %113 = vector.multi_reduction <add>, %110, %cst_35 [1] : vector<16x32xf32> to vector<16xf32>
    %114 = vector.shape_cast %113 : vector<16xf32> to vector<16x1xf32>
    %cst_36 = arith.constant 3.200000e+01 : f32
    %115 = vector.broadcast %cst_36 : f32 to vector<16x1xf32>
    %116 = arith.divf %114, %115 : vector<16x1xf32>
    %117 = arith.mulf %110, %110 : vector<16x32xf32>
    %cst_37 = arith.constant dense<0.000000e+00> : vector<16xf32>
    %118 = vector.multi_reduction <add>, %117, %cst_37 [1] : vector<16x32xf32> to vector<16xf32>
    %119 = vector.shape_cast %118 : vector<16xf32> to vector<16x1xf32>
    %cst_38 = arith.constant 3.200000e+01 : f32
    %120 = vector.broadcast %cst_38 : f32 to vector<16x1xf32>
    %121 = arith.divf %119, %120 : vector<16x1xf32>
    %122 = arith.mulf %116, %116 : vector<16x1xf32>
    %123 = arith.subf %121, %122 : vector<16x1xf32>
    %cst_39 = arith.constant 9.99999974E-6 : f32
    %124 = vector.broadcast %cst_39 : f32 to vector<16x1xf32>
    %125 = arith.addf %123, %124 : vector<16x1xf32>
    %126 = math.rsqrt %125 : vector<16x1xf32>
    %127 = vector.broadcast %116 : vector<16x1xf32> to vector<16x32xf32>
    %128 = arith.subf %110, %127 : vector<16x32xf32>
    %129 = vector.broadcast %126 : vector<16x1xf32> to vector<16x32xf32>
    %130 = arith.mulf %128, %129 : vector<16x32xf32>
    %131 = vector.broadcast %111 : vector<1x32xf32> to vector<16x32xf32>
    %132 = arith.mulf %130, %131 : vector<16x32xf32>
    %133 = vector.broadcast %112 : vector<1x32xf32> to vector<16x32xf32>
    %134 = arith.addf %132, %133 : vector<16x32xf32>
    %cst_40 = arith.constant 0.000000e+00 : f32
    %135 = vector.broadcast %cst_40 : f32 to vector<16x32xf32>
    %136 = arith.maximumf %134, %135 : vector<16x32xf32>
    %c2 = arith.constant 2 : index
    %c0_41 = arith.constant 0 : index
    %c0_42 = arith.constant 0 : index
    %137 = vector.load %arg2[%c2, %c0_41, %c0_42] : memref<3x32x128xf32, #tpu.memory_space<vmem>>, vector<1x32x128xf32>
    %138 = vector.shape_cast %137 : vector<1x32x128xf32> to vector<32x128xf32>
    %cst_43 = arith.constant dense<0.000000e+00> : vector<16x128xf32>
    %139 = tpu.matmul %136, %138, %cst_43 {dimension_numbers = #tpu.dot_dimension_numbers<[1], [0], [0], [1], [0, 0, 1, 1], [], []>} : vector<16x32xf32>, vector<32x128xf32>, vector<16x128xf32> -> vector<16x128xf32>
    %140 = vector.extract_strided_slice %1 {offsets = [11, 0], sizes = [1, 128], strides = [1, 1]} : vector<12x128xf32> to vector<1x128xf32>
    %141 = vector.broadcast %140 : vector<1x128xf32> to vector<16x128xf32>
    %142 = arith.addf %139, %141 : vector<16x128xf32>
    %c0_44 = arith.constant 0 : index
    %c0_45 = arith.constant 0 : index
    %143 = vector.load %arg5[%c0_44, %c0_45] : memref<16x128xf32, #tpu.memory_space<vmem>>, vector<16x128xf32>
    tpu.vector_store %arg5[%c0_44, %c0_45], %142 {strides = array<i32>} : memref<16x128xf32, #tpu.memory_space<vmem>>, vector<16x128xf32>,
    return
  }
}

</mosaic_0001>

<llo_original>
// kernel: resnet_forward.1
$region0: #{resnet_forward.1}
  #allocation0 [shape = 'u32[]', space=smem, size = 0x4, offset = 0x4, fixed_abs, tag = 'smem constant byte address 0x4 - core index']
  #allocation1 [shape = 'u32[144,128]{1,0:T(1,128)}', space=vmem, size = 0x12000, scoped, tag = 'internal scratch']
  %s0 = inlined_call_operand.vmem [shape: f32[16,6], index: 0, kind: input, shape index: {}]
  %s1 = inlined_call_operand.vmem [shape: f32[16,32], index: 1, kind: input, shape index: {}]
  %s2 = inlined_call_operand.vmem [shape: f32[3,32,128], index: 2, kind: input, shape index: {}]
  %s3 = inlined_call_operand.vmem [shape: f32[2,128,32], index: 3, kind: input, shape index: {}]
  %s4 = inlined_call_operand.vmem [shape: f32[12,128], index: 4, kind: input, shape index: {}]
  %s5 = inlined_call_operand.vmem [shape: f32[16,128], index: 5, kind: output, shape index: {}]
  %s6 = sld [smem:[#allocation0]]
  $region30: #{resnet_forward.1} parent=0
    _
  %s8 = ssub.s32 1, %s6
  %s9 = scalar_select 0, %s8, %s6
  // Predicated region
  $region2: #{resnet_forward.1} parent=0 // pred_check
    _
  $region3: #{resnet_forward.1} parent=0 // pred_check_branch
    %11 = sbr.rel (0) target = $region5
  $region4: #{resnet_forward.1} parent=0 // pred_region
    _
  $region5: #{resnet_forward.1} parent=0 // pred_fallthru
    _
  // Predicated region
  $region6: #{resnet_forward.1} parent=0 // pred_check
    _
  $region7: #{resnet_forward.1} parent=0 // pred_check_branch
    %13 = sbr.rel (0) target = $region9
  $region8: #{resnet_forward.1} parent=0 // pred_region
    _
  $region9: #{resnet_forward.1} parent=0 // pred_fallthru
    _
  // Predicated region
  $region10: #{resnet_forward.1} parent=0 // pred_check
    _
  $region11: #{resnet_forward.1} parent=0 // pred_check_branch
    %15 = sbr.rel (0) target = $region13
  $region12: #{resnet_forward.1} parent=0 // pred_region
    _
  $region13: #{resnet_forward.1} parent=0 // pred_fallthru
    _
  // Predicated region
  $region14: #{resnet_forward.1} parent=0 // pred_check
    _
  $region15: #{resnet_forward.1} parent=0 // pred_check_branch
    %17 = sbr.rel (0) target = $region17
  $region16: #{resnet_forward.1} parent=0 // pred_region
    _
  $region17: #{resnet_forward.1} parent=0 // pred_fallthru
    _
  // Predicated region
  $region18: #{resnet_forward.1} parent=0 // pred_check
    _
  $region19: #{resnet_forward.1} parent=0 // pred_check_branch
    %19 = sbr.rel (0) target = $region21
  $region20: #{resnet_forward.1} parent=0 // pred_region
    _
  $region21: #{resnet_forward.1} parent=0 // pred_fallthru
    _
  %v20 = vld [vmem:[%s0] sm:$0xff]
  %v21 = vld [vmem:[%s0 + $0x8] sm:$0xff]
  %v22 = vld [vmem:[%s4] sm:$0xff]
  %v23 = vld [vmem:[%s4 + $0x8] sm:$0xf]
  %v24 = vlaneseq
  %v25 = vand.u32 %v24, 127
  %v26 = vcvt.f32.s32.to.zero.pseudo %v20
  %v27 = vcvt.f32.s32.to.zero.pseudo %v21
  %28 = vset.pattern.permute.xlu0 4
  %29 = vperm.xlu0 %28, %v26
  %v30 = vpop.permute.xlu0 %29
  %31 = vset.pattern.permute.xlu0 4
  %32 = vperm.xlu0 %31, %v27
  %v33 = vpop.permute.xlu0 %32
  %vm34 = vcmp.eq.s32.totalorder %v30, %v25
  %vm35 = vcmp.eq.s32.totalorder %v33, %v25
  %v36 = vsel %vm34, 1, 0
  %v37 = vsel %vm35, 1, 0
  %v38 = vcvt.s32.f32 %v36
  %v39 = vcvt.s32.f32 %v37
  %v40 = vadd.f32 %v38, 0.0
  %v41 = vadd.f32 %v39, 0.0
  %v42 = vadd.s32 %v26, 3
  %v43 = vadd.s32 %v27, 3
  %44 = vset.pattern.permute.xlu0 5
  %45 = vperm.xlu0 %44, %v42
  %v46 = vpop.permute.xlu0 %45
  %47 = vset.pattern.permute.xlu0 5
  %48 = vperm.xlu0 %47, %v43
  %v49 = vpop.permute.xlu0 %48
  %vm50 = vcmp.eq.s32.totalorder %v46, %v25
  %vm51 = vcmp.eq.s32.totalorder %v49, %v25
  %v52 = vsel %vm50, 1, 0
  %v53 = vsel %vm51, 1, 0
  %v54 = vcvt.s32.f32 %v52
  %v55 = vcvt.s32.f32 %v53
  %v56 = vadd.f32 %v40, %v54
  %v57 = vadd.f32 %v41, %v55
  %60 = vrot.lane.b32.xlu0 %v56, 6
  %v61 = vpop.permute.xlu0 %60
  %62 = vrot.lane.b32.xlu0 %v57, 6
  %v63 = vpop.permute.xlu0 %62
  %vm66 = vcmask 48128
  %v67 = vsel %vm66, %v20, %v61
  %v68 = vsel %vm66, %v21, %v63
  %vm69 = vcmask 113664
  %v70 = vsel %vm69, %v67, 0.0
  %v71 = vsel %vm69, %v68, 0.0
  %v72 = vld [vmem:[%s1] sm:$0xff]
  %v73 = vld [vmem:[%s1 + $0x8] sm:$0xff]
  %v74 = vlaneseq
  %v75 = vshrl.u32 %v74, 7
  %v76 = vsub.s32 0, %v75
  %v77 = vrot.slane %v22, %v76
  %vm78 = vcmask 130048
  %v80 = vsel %vm78, %v70, 0
  %v83 = vsel %vm78, %v71, 0
  %85 = vmatprep.subr.mxu0 0.0
  %86 = vmatpush1.msra.mxu0 %v72
  %87 = vmatprep.subr.mxu0 0.0
  %88 = vmatpush1.msra.mxu0 %v73
  %89 = vmatprep.subr.mxu0 0.0
  %90 = vmatpush1.msra.mxu0 0.0
  %91 = vmatprep.subr.mxu0 0.0
  %92 = vmatpush1.msra.mxu0 0.0
  %93 = vmatprep.subr.mxu0 0.0
  %94 = vmatpush1.msra.mxu0 0.0
  %95 = vmatprep.subr.mxu0 0.0
  %96 = vmatpush1.msra.mxu0 0.0
  %97 = vmatprep.subr.mxu0 0.0
  %98 = vmatpush1.msra.mxu0 0.0
  %99 = vmatprep.subr.mxu0 0.0
  %100 = vmatpush1.msra.mxu0 0.0
  %101 = vmatprep.subr.mxu0 0.0
  %102 = vmatpush1.msra.mxu0 0.0
  %103 = vmatprep.subr.mxu0 0.0
  %104 = vmatpush1.msra.mxu0 0.0
  %105 = vmatprep.subr.mxu0 0.0
  %106 = vmatpush1.msra.mxu0 0.0
  %107 = vmatprep.subr.mxu0 0.0
  %108 = vmatpush1.msra.mxu0 0.0
  %109 = vmatprep.subr.mxu0 0.0
  %110 = vmatpush1.msra.mxu0 0.0
  %111 = vmatprep.subr.mxu0 0.0
  %112 = vmatpush1.msra.mxu0 0.0
  %113 = vmatprep.subr.mxu0 0.0
  %114 = vmatpush1.msra.mxu0 0.0
  %115 = vmatprep.subr.mxu0 0.0
  %116 = vmatpush1.msra.mxu0 0.0
  %117 = vmatprep.subr.mxu0 0.0
  %118 = vmatpush1.msra.mxu0 0.0
  %119 = vmatprep.subr.mxu0 0.0
  %120 = vmatpush1.msra.mxu0 0.0
  %121 = vmatprep.subr.mxu0 0.0
  %122 = vmatpush1.msra.mxu0 0.0
  %123 = vmatprep.subr.mxu0 0.0
  %124 = vmatpush1.msra.mxu0 0.0
  %125 = vmatprep.subr.mxu0 0.0
  %126 = vmatpush1.msra.mxu0 0.0
  %127 = vmatprep.subr.mxu0 0.0
  %128 = vmatpush1.msra.mxu0 0.0
  %129 = vmatprep.subr.mxu0 0.0
  %130 = vmatpush1.msra.mxu0 0.0
  %131 = vmatprep.subr.mxu0 0.0
  %132 = vmatpush1.msra.mxu0 0.0
  %133 = vmatprep.subr.mxu0 0.0
  %134 = vmatpush1.msra.mxu0 0.0
  %135 = vmatprep.subr.mxu0 0.0
  %136 = vmatpush1.msra.mxu0 0.0
  %137 = vmatprep.subr.mxu0 0.0
  %138 = vmatpush1.msra.mxu0 0.0
  %139 = vmatprep.subr.mxu0 0.0
  %140 = vmatpush1.msra.mxu0 0.0
  %141 = vmatprep.subr.mxu0 0.0
  %142 = vmatpush1.msra.mxu0 0.0
  %143 = vmatprep.subr.mxu0 0.0
  %144 = vmatpush1.msra.mxu0 0.0
  %145 = vmatprep.subr.mxu0 0.0
  %146 = vmatpush1.msra.mxu0 0.0
  %147 = vmatprep.subr.mxu0 0.0
  %148 = vmatpush1.msra.mxu0 0.0
  %149 = vmatprep.mubr.f32.mxu0 0.0
  %150 = vmatmul.mubr.f32.gmra.mrb[0].mxu0 %v80
  %v151 = vpop.f32.mrb[0].mxu0
  %v152 = vadd.f32 %v77, %v151
  %v153 = vpop.f32.mrb[0].mxu0
  %154 = vmatprep.mubr.f32.mxu0 0.0
  %155 = vmatmul.mubr.f32.gmra.mrb[0].mxu0 %v83
  %v156 = vpop.f32.mrb[0].mxu0
  %v157 = vadd.f32 %v77, %v156
  %v158 = vpop.f32.mrb[0].mxu0
  %159 = vdwg.mxu0
  %vm160 = vcmask 261120
  %v161 = vsel %vm160, %v152, 0.0
  %162 = vadd.xlane.f32.xlu0 %v161
  %v163 = vpop.xlane.xlu0 %162
  %v164 = vsel %vm160, %v157, 0.0
  %165 = vadd.xlane.f32.xlu0 %v164
  %v166 = vpop.xlane.xlu0 %165
  %v167 = vrcp.pop 32.0
  %v168 = vmul.f32 %v163, %v167
  %v169 = vmul.f32 %v166, %v167
  %v170 = vmul.f32 %v152, %v152
  %v171 = vmul.f32 %v157, %v157
  %v172 = vsel %vm160, %v170, 0.0
  %173 = vadd.xlane.f32.xlu0 %v172
  %v174 = vpop.xlane.xlu0 %173
  %v175 = vsel %vm160, %v171, 0.0
  %176 = vadd.xlane.f32.xlu0 %v175
  %v177 = vpop.xlane.xlu0 %176
  %v178 = vmul.f32 %v174, %v167
  %v179 = vmul.f32 %v177, %v167
  %v180 = vmul.f32 %v168, %v168
  %v181 = vmul.f32 %v169, %v169
  %v182 = vsub.f32 %v178, %v180
  %v183 = vsub.f32 %v179, %v181
  %v184 = vadd.f32 %v182, 1e-05
  %v185 = vadd.f32 %v183, 1e-05
  %v186 = vrsqrt.pop %v184
  %v187 = vrsqrt.pop %v185
  %v188 = vsub.f32 %v152, %v168
  %v189 = vsub.f32 %v157, %v169
  %v190 = vmul.f32 %v188, %v186
  %v191 = vmul.f32 %v189, %v187
  %v192 = vlaneseq
  %v193 = vshrl.u32 %v192, 7
  %v194 = vsub.s32 5, %v193
  %v195 = vrot.slane %v22, %v194
  %v196 = vmul.f32 %v190, %v195
  %v197 = vmul.f32 %v191, %v195
  %v198 = vlaneseq
  %v199 = vshrl.u32 %v198, 7
  %v200 = vsub.s32 7, %v199
  %v201 = vrot.slane %v22, %v200
  %v202 = vadd.f32 %v196, %v201
  %v203 = vadd.f32 %v197, %v201
  %v204 = vld [vmem:[%s2] sm:$0xff]
  %v205 = vld [vmem:[%s2 + $0x8] sm:$0xff]
  %v206 = vld [vmem:[%s2 + $0x10] sm:$0xff]
  %v207 = vld [vmem:[%s2 + $0x18] sm:$0xff]
  %v208 = vlaneseq
  %v209 = vshrl.u32 %v208, 7
  %v210 = vsub.s32 1, %v209
  %v211 = vrot.slane %v22, %v210
  %v213 = vsel %vm160, %v202, 0
  %v216 = vsel %vm160, %v203, 0
  %218 = vmatprep.subr.mxu0 0.0
  %219 = vmatpush1.msra.mxu0 %v204
  %220 = vmatprep.subr.mxu0 0.0
  %221 = vmatpush1.msra.mxu0 %v205
  %222 = vmatprep.subr.mxu0 0.0
  %223 = vmatpush1.msra.mxu0 %v206
  %224 = vmatprep.subr.mxu0 0.0
  %225 = vmatpush1.msra.mxu0 %v207
  %226 = vmatprep.subr.mxu0 0.0
  %227 = vmatpush1.msra.mxu0 0.0
  %228 = vmatprep.subr.mxu0 0.0
  %229 = vmatpush1.msra.mxu0 0.0
  %230 = vmatprep.subr.mxu0 0.0
  %231 = vmatpush1.msra.mxu0 0.0
  %232 = vmatprep.subr.mxu0 0.0
  %233 = vmatpush1.msra.mxu0 0.0
  %234 = vmatprep.subr.mxu0 0.0
  %235 = vmatpush1.msra.mxu0 0.0
  %236 = vmatprep.subr.mxu0 0.0
  %237 = vmatpush1.msra.mxu0 0.0
  %238 = vmatprep.subr.mxu0 0.0
  %239 = vmatpush1.msra.mxu0 0.0
  %240 = vmatprep.subr.mxu0 0.0
  %241 = vmatpush1.msra.mxu0 0.0
  %242 = vmatprep.subr.mxu0 0.0
  %243 = vmatpush1.msra.mxu0 0.0
  %244 = vmatprep.subr.mxu0 0.0
  %245 = vmatpush1.msra.mxu0 0.0
  %246 = vmatprep.subr.mxu0 0.0
  %247 = vmatpush1.msra.mxu0 0.0
  %248 = vmatprep.subr.mxu0 0.0
  %249 = vmatpush1.msra.mxu0 0.0
  %250 = vmatprep.subr.mxu0 0.0
  %251 = vmatpush1.msra.mxu0 0.0
  %252 = vmatprep.subr.mxu0 0.0
  %253 = vmatpush1.msra.mxu0 0.0
  %254 = vmatprep.subr.mxu0 0.0
  %255 = vmatpush1.msra.mxu0 0.0
  %256 = vmatprep.subr.mxu0 0.0
  %257 = vmatpush1.msra.mxu0 0.0
  %258 = vmatprep.subr.mxu0 0.0
  %259 = vmatpush1.msra.mxu0 0.0
  %260 = vmatprep.subr.mxu0 0.0
  %261 = vmatpush1.msra.mxu0 0.0
  %262 = vmatprep.subr.mxu0 0.0
  %263 = vmatpush1.msra.mxu0 0.0
  %264 = vmatprep.subr.mxu0 0.0
  %265 = vmatpush1.msra.mxu0 0.0
  %266 = vmatprep.subr.mxu0 0.0
  %267 = vmatpush1.msra.mxu0 0.0
  %268 = vmatprep.subr.mxu0 0.0
  %269 = vmatpush1.msra.mxu0 0.0
  %270 = vmatprep.subr.mxu0 0.0
  %271 = vmatpush1.msra.mxu0 0.0
  %272 = vmatprep.subr.mxu0 0.0
  %273 = vmatpush1.msra.mxu0 0.0
  %274 = vmatprep.subr.mxu0 0.0
  %275 = vmatpush1.msra.mxu0 0.0
  %276 = vmatprep.subr.mxu0 0.0
  %277 = vmatpush1.msra.mxu0 0.0
  %278 = vmatprep.subr.mxu0 0.0
  %279 = vmatpush1.msra.mxu0 0.0
  %280 = vmatprep.subr.mxu0 0.0
  %281 = vmatpush1.msra.mxu0 0.0
  %282 = vmatprep.mubr.f32.mxu0 0.0
  %283 = vmatmul.mubr.f32.gmra.mrb[0].mxu0 %v213
  %v284 = vpop.f32.mrb[0].mxu0
  %v285 = vadd.f32 %v211, %v284
  %v286 = vpop.f32.mrb[0].mxu0
  %287 = vmatprep.mubr.f32.mxu0 0.0
  %288 = vmatmul.mubr.f32.gmra.mrb[0].mxu0 %v216
  %v289 = vpop.f32.mrb[0].mxu0
  %v290 = vadd.f32 %v211, %v289
  %v291 = vpop.f32.mrb[0].mxu0
  %292 = vdwg.mxu0
  %293 = vrot.lane.b32.xlu0 %v285, 64
  %v294 = vpop.permute.xlu0 %293
  %295 = vrot.lane.b32.xlu0 %v290, 64
  %v296 = vpop.permute.xlu0 %295
  %v297 = vmax.f32 %v294, 0.0
  %v298 = vmax.f32 %v296, 0.0
  %v299 = vmul.f32 %v285, %v297
  %v300 = vmul.f32 %v290, %v298
  %v301 = vld [vmem:[%s3] sm:$0xff]
  %v302 = vld [vmem:[%s3 + $0x8] sm:$0xff]
  %v303 = vld [vmem:[%s3 + $0x10] sm:$0xff]
  %v304 = vld [vmem:[%s3 + $0x18] sm:$0xff]
  %v305 = vld [vmem:[%s3 + $0x20] sm:$0xff]
  %v306 = vld [vmem:[%s3 + $0x28] sm:$0xff]
  %v307 = vld [vmem:[%s3 + $0x30] sm:$0xff]
  %v308 = vld [vmem:[%s3 + $0x38] sm:$0xff]
  %v309 = vld [vmem:[%s3 + $0x40] sm:$0xff]
  %v310 = vld [vmem:[%s3 + $0x48] sm:$0xff]
  %v311 = vld [vmem:[%s3 + $0x50] sm:$0xff]
  %v312 = vld [vmem:[%s3 + $0x58] sm:$0xff]
  %v313 = vld [vmem:[%s3 + $0x60] sm:$0xff]
  %v314 = vld [vmem:[%s3 + $0x68] sm:$0xff]
  %v315 = vld [vmem:[%s3 + $0x70] sm:$0xff]
  %v316 = vld [vmem:[%s3 + $0x78] sm:$0xff]
  %v317 = vlaneseq
  %v318 = vshrl.u32 %v317, 7
  %v319 = vsub.s32 3, %v318
  %v320 = vrot.slane %v22, %v319
  %321 = vmatprep.subr.mxu0 0.0
  %322 = vmatpush1.msra.mxu0 %v301
  %323 = vmatprep.subr.mxu0 0.0
  %324 = vmatpush1.msra.mxu0 %v302
  %325 = vmatprep.subr.mxu0 0.0
  %326 = vmatpush1.msra.mxu0 %v303
  %327 = vmatprep.subr.mxu0 0.0
  %328 = vmatpush1.msra.mxu0 %v304
  %329 = vmatprep.subr.mxu0 0.0
  %330 = vmatpush1.msra.mxu0 %v305
  %331 = vmatprep.subr.mxu0 0.0
  %332 = vmatpush1.msra.mxu0 %v306
  %333 = vmatprep.subr.mxu0 0.0
  %334 = vmatpush1.msra.mxu0 %v307
  %335 = vmatprep.subr.mxu0 0.0
  %336 = vmatpush1.msra.mxu0 %v308
  %337 = vmatprep.subr.mxu0 0.0
  %338 = vmatpush1.msra.mxu0 %v309
  %339 = vmatprep.subr.mxu0 0.0
  %340 = vmatpush1.msra.mxu0 %v310
  %341 = vmatprep.subr.mxu0 0.0
  %342 = vmatpush1.msra.mxu0 %v311
  %343 = vmatprep.subr.mxu0 0.0
  %344 = vmatpush1.msra.mxu0 %v312
  %345 = vmatprep.subr.mxu0 0.0
  %346 = vmatpush1.msra.mxu0 %v313
  %347 = vmatprep.subr.mxu0 0.0
  %348 = vmatpush1.msra.mxu0 %v314
  %349 = vmatprep.subr.mxu0 0.0
  %350 = vmatpush1.msra.mxu0 %v315
  %351 = vmatprep.subr.mxu0 0.0
  %352 = vmatpush1.msra.mxu0 %v316
  %353 = vmatprep.subr.mxu0 0.0
  %354 = vmatpush1.msra.mxu0 0.0
  %355 = vmatprep.subr.mxu0 0.0
  %356 = vmatpush1.msra.mxu0 0.0
  %357 = vmatprep.subr.mxu0 0.0
  %358 = vmatpush1.msra.mxu0 0.0
  %359 = vmatprep.subr.mxu0 0.0
  %360 = vmatpush1.msra.mxu0 0.0
  %361 = vmatprep.subr.mxu0 0.0
  %362 = vmatpush1.msra.mxu0 0.0
  %363 = vmatprep.subr.mxu0 0.0
  %364 = vmatpush1.msra.mxu0 0.0
  %365 = vmatprep.subr.mxu0 0.0
  %366 = vmatpush1.msra.mxu0 0.0
  %367 = vmatprep.subr.mxu0 0.0
  %368 = vmatpush1.msra.mxu0 0.0
  %369 = vmatprep.subr.mxu0 0.0
  %370 = vmatpush1.msra.mxu0 0.0
  %371 = vmatprep.subr.mxu0 0.0
  %372 = vmatpush1.msra.mxu0 0.0
  %373 = vmatprep.subr.mxu0 0.0
  %374 = vmatpush1.msra.mxu0 0.0
  %375 = vmatprep.subr.mxu0 0.0
  %376 = vmatpush1.msra.mxu0 0.0
  %377 = vmatprep.subr.mxu0 0.0
  %378 = vmatpush1.msra.mxu0 0.0
  %379 = vmatprep.subr.mxu0 0.0
  %380 = vmatpush1.msra.mxu0 0.0
  %381 = vmatprep.subr.mxu0 0.0
  %382 = vmatpush1.msra.mxu0 0.0
  %383 = vmatprep.subr.mxu0 0.0
  %384 = vmatpush1.msra.mxu0 0.0
  %385 = vmatprep.mubr.f32.mxu0 0.0
  %386 = vmatmul.mubr.f32.gmra.mrb[0].mxu0 %v299
  %v387 = vpop.f32.mrb[0].mxu0
  %v388 = vadd.f32 %v320, %v387
  %v389 = vpop.f32.mrb[0].mxu0
  %390 = vmatprep.mubr.f32.mxu0 0.0
  %391 = vmatmul.mubr.f32.gmra.mrb[0].mxu0 %v300
  %v392 = vpop.f32.mrb[0].mxu0
  %v393 = vadd.f32 %v320, %v392
  %v394 = vpop.f32.mrb[0].mxu0
  %395 = vdwg.mxu0
  %v396 = vadd.f32 %v152, %v388
  %v397 = vadd.f32 %v157, %v393
  %v398 = vsel %vm160, %v396, 0.0
  %399 = vadd.xlane.f32.xlu0 %v398
  %v400 = vpop.xlane.xlu0 %399
  %v401 = vsel %vm160, %v397, 0.0
  %402 = vadd.xlane.f32.xlu0 %v401
  %v403 = vpop.xlane.xlu0 %402
  %v404 = vmul.f32 %v400, %v167
  %v405 = vmul.f32 %v403, %v167
  %v406 = vmul.f32 %v396, %v396
  %v407 = vmul.f32 %v397, %v397
  %v408 = vsel %vm160, %v406, 0.0
  %409 = vadd.xlane.f32.xlu0 %v408
  %v410 = vpop.xlane.xlu0 %409
  %v411 = vsel %vm160, %v407, 0.0
  %412 = vadd.xlane.f32.xlu0 %v411
  %v413 = vpop.xlane.xlu0 %412
  %v414 = vmul.f32 %v410, %v167
  %v415 = vmul.f32 %v413, %v167
  %v416 = vmul.f32 %v404, %v404
  %v417 = vmul.f32 %v405, %v405
  %v418 = vsub.f32 %v414, %v416
  %v419 = vsub.f32 %v415, %v417
  %v420 = vadd.f32 %v418, 1e-05
  %v421 = vadd.f32 %v419, 1e-05
  %v422 = vrsqrt.pop %v420
  %v423 = vrsqrt.pop %v421
  %v424 = vsub.f32 %v396, %v404
  %v425 = vsub.f32 %v397, %v405
  %v426 = vmul.f32 %v424, %v422
  %v427 = vmul.f32 %v425, %v423
  %v428 = vlaneseq
  %v429 = vshrl.u32 %v428, 7
  %v430 = vsub.s32 6, %v429
  %v431 = vrot.slane %v22, %v430
  %v432 = vmul.f32 %v426, %v431
  %v433 = vmul.f32 %v427, %v431
  %v434 = vlaneseq
  %v435 = vshrl.u32 %v434, 7
  %v436 = vsub.s32 0, %v435
  %v437 = vrot.slane %v23, %v436
  %v438 = vadd.f32 %v432, %v437
  %v439 = vadd.f32 %v433, %v437
  %s440 = scalar_lea.vmem %s2, 32
  %v441 = vld [vmem:[%s440] sm:$0xff]
  %v442 = vld [vmem:[%s440 + $0x8] sm:$0xff]
  %v443 = vld [vmem:[%s440 + $0x10] sm:$0xff]
  %v444 = vld [vmem:[%s440 + $0x18] sm:$0xff]
  %v445 = vlaneseq
  %v446 = vshrl.u32 %v445, 7
  %v447 = vsub.s32 2, %v446
  %v448 = vrot.slane %v22, %v447
  %v450 = vsel %vm160, %v438, 0
  %v453 = vsel %vm160, %v439, 0
  %455 = vmatprep.subr.mxu0 0.0
  %456 = vmatpush1.msra.mxu0 %v441
  %457 = vmatprep.subr.mxu0 0.0
  %458 = vmatpush1.msra.mxu0 %v442
  %459 = vmatprep.subr.mxu0 0.0
  %460 = vmatpush1.msra.mxu0 %v443
  %461 = vmatprep.subr.mxu0 0.0
  %462 = vmatpush1.msra.mxu0 %v444
  %463 = vmatprep.subr.mxu0 0.0
  %464 = vmatpush1.msra.mxu0 0.0
  %465 = vmatprep.subr.mxu0 0.0
  %466 = vmatpush1.msra.mxu0 0.0
  %467 = vmatprep.subr.mxu0 0.0
  %468 = vmatpush1.msra.mxu0 0.0
  %469 = vmatprep.subr.mxu0 0.0
  %470 = vmatpush1.msra.mxu0 0.0
  %471 = vmatprep.subr.mxu0 0.0
  %472 = vmatpush1.msra.mxu0 0.0
  %473 = vmatprep.subr.mxu0 0.0
  %474 = vmatpush1.msra.mxu0 0.0
  %475 = vmatprep.subr.mxu0 0.0
  %476 = vmatpush1.msra.mxu0 0.0
  %477 = vmatprep.subr.mxu0 0.0
  %478 = vmatpush1.msra.mxu0 0.0
  %479 = vmatprep.subr.mxu0 0.0
  %480 = vmatpush1.msra.mxu0 0.0
  %481 = vmatprep.subr.mxu0 0.0
  %482 = vmatpush1.msra.mxu0 0.0
  %483 = vmatprep.subr.mxu0 0.0
  %484 = vmatpush1.msra.mxu0 0.0
  %485 = vmatprep.subr.mxu0 0.0
  %486 = vmatpush1.msra.mxu0 0.0
  %487 = vmatprep.subr.mxu0 0.0
  %488 = vmatpush1.msra.mxu0 0.0
  %489 = vmatprep.subr.mxu0 0.0
  %490 = vmatpush1.msra.mxu0 0.0
  %491 = vmatprep.subr.mxu0 0.0
  %492 = vmatpush1.msra.mxu0 0.0
  %493 = vmatprep.subr.mxu0 0.0
  %494 = vmatpush1.msra.mxu0 0.0
  %495 = vmatprep.subr.mxu0 0.0
  %496 = vmatpush1.msra.mxu0 0.0
  %497 = vmatprep.subr.mxu0 0.0
  %498 = vmatpush1.msra.mxu0 0.0
  %499 = vmatprep.subr.mxu0 0.0
  %500 = vmatpush1.msra.mxu0 0.0
  %501 = vmatprep.subr.mxu0 0.0
  %502 = vmatpush1.msra.mxu0 0.0
  %503 = vmatprep.subr.mxu0 0.0
  %504 = vmatpush1.msra.mxu0 0.0
  %505 = vmatprep.subr.mxu0 0.0
  %506 = vmatpush1.msra.mxu0 0.0
  %507 = vmatprep.subr.mxu0 0.0
  %508 = vmatpush1.msra.mxu0 0.0
  %509 = vmatprep.subr.mxu0 0.0
  %510 = vmatpush1.msra.mxu0 0.0
  %511 = vmatprep.subr.mxu0 0.0
  %512 = vmatpush1.msra.mxu0 0.0
  %513 = vmatprep.subr.mxu0 0.0
  %514 = vmatpush1.msra.mxu0 0.0
  %515 = vmatprep.subr.mxu0 0.0
  %516 = vmatpush1.msra.mxu0 0.0
  %517 = vmatprep.subr.mxu0 0.0
  %518 = vmatpush1.msra.mxu0 0.0
  %519 = vmatprep.mubr.f32.mxu0 0.0
  %520 = vmatmul.mubr.f32.gmra.mrb[0].mxu0 %v450
  %v521 = vpop.f32.mrb[0].mxu0
  %v522 = vadd.f32 %v448, %v521
  %v523 = vpop.f32.mrb[0].mxu0
  %524 = vmatprep.mubr.f32.mxu0 0.0
  %525 = vmatmul.mubr.f32.gmra.mrb[0].mxu0 %v453
  %v526 = vpop.f32.mrb[0].mxu0
  %v527 = vadd.f32 %v448, %v526
  %v528 = vpop.f32.mrb[0].mxu0
  %529 = vdwg.mxu0
  %530 = vrot.lane.b32.xlu0 %v522, 64
  %v531 = vpop.permute.xlu0 %530
  %532 = vrot.lane.b32.xlu0 %v527, 64
  %v533 = vpop.permute.xlu0 %532
  %v534 = vmax.f32 %v531, 0.0
  %v535 = vmax.f32 %v533, 0.0
  %v536 = vmul.f32 %v522, %v534
  %v537 = vmul.f32 %v527, %v535
  %s538 = scalar_lea.vmem %s3, 128
  %v539 = vld [vmem:[%s538] sm:$0xff]
  %v540 = vld [vmem:[%s538 + $0x8] sm:$0xff]
  %v541 = vld [vmem:[%s538 + $0x10] sm:$0xff]
  %v542 = vld [vmem:[%s538 + $0x18] sm:$0xff]
  %v543 = vld [vmem:[%s538 + $0x20] sm:$0xff]
  %v544 = vld [vmem:[%s538 + $0x28] sm:$0xff]
  %v545 = vld [vmem:[%s538 + $0x30] sm:$0xff]
  %v546 = vld [vmem:[%s538 + $0x38] sm:$0xff]
  %v547 = vld [vmem:[%s538 + $0x40] sm:$0xff]
  %v548 = vld [vmem:[%s538 + $0x48] sm:$0xff]
  %v549 = vld [vmem:[%s538 + $0x50] sm:$0xff]
  %v550 = vld [vmem:[%s538 + $0x58] sm:$0xff]
  %v551 = vld [vmem:[%s538 + $0x60] sm:$0xff]
  %v552 = vld [vmem:[%s538 + $0x68] sm:$0xff]
  %v553 = vld [vmem:[%s538 + $0x70] sm:$0xff]
  %v554 = vld [vmem:[%s538 + $0x78] sm:$0xff]
  %v555 = vlaneseq
  %v556 = vshrl.u32 %v555, 7
  %v557 = vsub.s32 4, %v556
  %v558 = vrot.slane %v22, %v557
  %559 = vmatprep.subr.mxu0 0.0
  %560 = vmatpush1.msra.mxu0 %v539
  %561 = vmatprep.subr.mxu0 0.0
  %562 = vmatpush1.msra.mxu0 %v540
  %563 = vmatprep.subr.mxu0 0.0
  %564 = vmatpush1.msra.mxu0 %v541
  %565 = vmatprep.subr.mxu0 0.0
  %566 = vmatpush1.msra.mxu0 %v542
  %567 = vmatprep.subr.mxu0 0.0
  %568 = vmatpush1.msra.mxu0 %v543
  %569 = vmatprep.subr.mxu0 0.0
  %570 = vmatpush1.msra.mxu0 %v544
  %571 = vmatprep.subr.mxu0 0.0
  %572 = vmatpush1.msra.mxu0 %v545
  %573 = vmatprep.subr.mxu0 0.0
  %574 = vmatpush1.msra.mxu0 %v546
  %575 = vmatprep.subr.mxu0 0.0
  %576 = vmatpush1.msra.mxu0 %v547
  %577 = vmatprep.subr.mxu0 0.0
  %578 = vmatpush1.msra.mxu0 %v548
  %579 = vmatprep.subr.mxu0 0.0
  %580 = vmatpush1.msra.mxu0 %v549
  %581 = vmatprep.subr.mxu0 0.0
  %582 = vmatpush1.msra.mxu0 %v550
  %583 = vmatprep.subr.mxu0 0.0
  %584 = vmatpush1.msra.mxu0 %v551
  %585 = vmatprep.subr.mxu0 0.0
  %586 = vmatpush1.msra.mxu0 %v552
  %587 = vmatprep.subr.mxu0 0.0
  %588 = vmatpush1.msra.mxu0 %v553
  %589 = vmatprep.subr.mxu0 0.0
  %590 = vmatpush1.msra.mxu0 %v554
  %591 = vmatprep.subr.mxu0 0.0
  %592 = vmatpush1.msra.mxu0 0.0
  %593 = vmatprep.subr.mxu0 0.0
  %594 = vmatpush1.msra.mxu0 0.0
  %595 = vmatprep.subr.mxu0 0.0
  %596 = vmatpush1.msra.mxu0 0.0
  %597 = vmatprep.subr.mxu0 0.0
  %598 = vmatpush1.msra.mxu0 0.0
  %599 = vmatprep.subr.mxu0 0.0
  %600 = vmatpush1.msra.mxu0 0.0
  %601 = vmatprep.subr.mxu0 0.0
  %602 = vmatpush1.msra.mxu0 0.0
  %603 = vmatprep.subr.mxu0 0.0
  %604 = vmatpush1.msra.mxu0 0.0
  %605 = vmatprep.subr.mxu0 0.0
  %606 = vmatpush1.msra.mxu0 0.0
  %607 = vmatprep.subr.mxu0 0.0
  %608 = vmatpush1.msra.mxu0 0.0
  %609 = vmatprep.subr.mxu0 0.0
  %610 = vmatpush1.msra.mxu0 0.0
  %611 = vmatprep.subr.mxu0 0.0
  %612 = vmatpush1.msra.mxu0 0.0
  %613 = vmatprep.subr.mxu0 0.0
  %614 = vmatpush1.msra.mxu0 0.0
  %615 = vmatprep.subr.mxu0 0.0
  %616 = vmatpush1.msra.mxu0 0.0
  %617 = vmatprep.subr.mxu0 0.0
  %618 = vmatpush1.msra.mxu0 0.0
  %619 = vmatprep.subr.mxu0 0.0
  %620 = vmatpush1.msra.mxu0 0.0
  %621 = vmatprep.subr.mxu0 0.0
  %622 = vmatpush1.msra.mxu0 0.0
  %623 = vmatprep.mubr.f32.mxu0 0.0
  %624 = vmatmul.mubr.f32.gmra.mrb[0].mxu0 %v536
  %v625 = vpop.f32.mrb[0].mxu0
  %v626 = vadd.f32 %v558, %v625
  %v627 = vpop.f32.mrb[0].mxu0
  %628 = vmatprep.mubr.f32.mxu0 0.0
  %629 = vmatmul.mubr.f32.gmra.mrb[0].mxu0 %v537
  %v630 = vpop.f32.mrb[0].mxu0
  %v631 = vadd.f32 %v558, %v630
  %v632 = vpop.f32.mrb[0].mxu0
  %633 = vdwg.mxu0
  %v634 = vadd.f32 %v396, %v626
  %v635 = vadd.f32 %v397, %v631
  %v636 = vsel %vm160, %v634, 0.0
  %637 = vadd.xlane.f32.xlu0 %v636
  %v638 = vpop.xlane.xlu0 %637
  %v639 = vsel %vm160, %v635, 0.0
  %640 = vadd.xlane.f32.xlu0 %v639
  %v641 = vpop.xlane.xlu0 %640
  %v642 = vmul.f32 %v638, %v167
  %v643 = vmul.f32 %v641, %v167
  %v644 = vmul.f32 %v634, %v634
  %v645 = vmul.f32 %v635, %v635
  %v646 = vsel %vm160, %v644, 0.0
  %647 = vadd.xlane.f32.xlu0 %v646
  %v648 = vpop.xlane.xlu0 %647
  %v649 = vsel %vm160, %v645, 0.0
  %650 = vadd.xlane.f32.xlu0 %v649
  %v651 = vpop.xlane.xlu0 %650
  %v652 = vmul.f32 %v648, %v167
  %v653 = vmul.f32 %v651, %v167
  %v654 = vmul.f32 %v642, %v642
  %v655 = vmul.f32 %v643, %v643
  %v656 = vsub.f32 %v652, %v654
  %v657 = vsub.f32 %v653, %v655
  %v658 = vadd.f32 %v656, 1e-05
  %v659 = vadd.f32 %v657, 1e-05
  %v660 = vrsqrt.pop %v658
  %v661 = vrsqrt.pop %v659
  %v662 = vsub.f32 %v634, %v642
  %v663 = vsub.f32 %v635, %v643
  %v664 = vmul.f32 %v662, %v660
  %v665 = vmul.f32 %v663, %v661
  %v666 = vlaneseq
  %v667 = vshrl.u32 %v666, 7
  %v668 = vsub.s32 1, %v667
  %v669 = vrot.slane %v23, %v668
  %v670 = vmul.f32 %v664, %v669
  %v671 = vmul.f32 %v665, %v669
  %v672 = vlaneseq
  %v673 = vshrl.u32 %v672, 7
  %v674 = vsub.s32 2, %v673
  %v675 = vrot.slane %v23, %v674
  %v676 = vadd.f32 %v670, %v675
  %v677 = vadd.f32 %v671, %v675
  %v678 = vmax.f32 %v676, 0.0
  %v679 = vmax.f32 %v677, 0.0
  %s680 = scalar_lea.vmem %s2, 64
  %v681 = vld [vmem:[%s680] sm:$0xff]
  %v682 = vld [vmem:[%s680 + $0x8] sm:$0xff]
  %v683 = vld [vmem:[%s680 + $0x10] sm:$0xff]
  %v684 = vld [vmem:[%s680 + $0x18] sm:$0xff]
  %v685 = vlaneseq
  %v686 = vshrl.u32 %v685, 7
  %v687 = vsub.s32 3, %v686
  %v688 = vrot.slane %v23, %v687
  %v690 = vsel %vm160, %v678, 0
  %v693 = vsel %vm160, %v679, 0
  %695 = vmatprep.subr.mxu0 0.0
  %696 = vmatpush1.msra.mxu0 %v681
  %697 = vmatprep.subr.mxu0 0.0
  %698 = vmatpush1.msra.mxu0 %v682
  %699 = vmatprep.subr.mxu0 0.0
  %700 = vmatpush1.msra.mxu0 %v683
  %701 = vmatprep.subr.mxu0 0.0
  %702 = vmatpush1.msra.mxu0 %v684
  %703 = vmatprep.subr.mxu0 0.0
  %704 = vmatpush1.msra.mxu0 0.0
  %705 = vmatprep.subr.mxu0 0.0
  %706 = vmatpush1.msra.mxu0 0.0
  %707 = vmatprep.subr.mxu0 0.0
  %708 = vmatpush1.msra.mxu0 0.0
  %709 = vmatprep.subr.mxu0 0.0
  %710 = vmatpush1.msra.mxu0 0.0
  %711 = vmatprep.subr.mxu0 0.0
  %712 = vmatpush1.msra.mxu0 0.0
  %713 = vmatprep.subr.mxu0 0.0
  %714 = vmatpush1.msra.mxu0 0.0
  %715 = vmatprep.subr.mxu0 0.0
  %716 = vmatpush1.msra.mxu0 0.0
  %717 = vmatprep.subr.mxu0 0.0
  %718 = vmatpush1.msra.mxu0 0.0
  %719 = vmatprep.subr.mxu0 0.0
  %720 = vmatpush1.msra.mxu0 0.0
  %721 = vmatprep.subr.mxu0 0.0
  %722 = vmatpush1.msra.mxu0 0.0
  %723 = vmatprep.subr.mxu0 0.0
  %724 = vmatpush1.msra.mxu0 0.0
  %725 = vmatprep.subr.mxu0 0.0
  %726 = vmatpush1.msra.mxu0 0.0
  %727 = vmatprep.subr.mxu0 0.0
  %728 = vmatpush1.msra.mxu0 0.0
  %729 = vmatprep.subr.mxu0 0.0
  %730 = vmatpush1.msra.mxu0 0.0
  %731 = vmatprep.subr.mxu0 0.0
  %732 = vmatpush1.msra.mxu0 0.0
  %733 = vmatprep.subr.mxu0 0.0
  %734 = vmatpush1.msra.mxu0 0.0
  %735 = vmatprep.subr.mxu0 0.0
  %736 = vmatpush1.msra.mxu0 0.0
  %737 = vmatprep.subr.mxu0 0.0
  %738 = vmatpush1.msra.mxu0 0.0
  %739 = vmatprep.subr.mxu0 0.0
  %740 = vmatpush1.msra.mxu0 0.0
  %741 = vmatprep.subr.mxu0 0.0
  %742 = vmatpush1.msra.mxu0 0.0
  %743 = vmatprep.subr.mxu0 0.0
  %744 = vmatpush1.msra.mxu0 0.0
  %745 = vmatprep.subr.mxu0 0.0
  %746 = vmatpush1.msra.mxu0 0.0
  %747 = vmatprep.subr.mxu0 0.0
  %748 = vmatpush1.msra.mxu0 0.0
  %749 = vmatprep.subr.mxu0 0.0
  %750 = vmatpush1.msra.mxu0 0.0
  %751 = vmatprep.subr.mxu0 0.0
  %752 = vmatpush1.msra.mxu0 0.0
  %753 = vmatprep.subr.mxu0 0.0
  %754 = vmatpush1.msra.mxu0 0.0
  %755 = vmatprep.subr.mxu0 0.0
  %756 = vmatpush1.msra.mxu0 0.0
  %757 = vmatprep.subr.mxu0 0.0
  %758 = vmatpush1.msra.mxu0 0.0
  %759 = vmatprep.mubr.f32.mxu0 0.0
  %760 = vmatmul.mubr.f32.gmra.mrb[0].mxu0 %v690
  %v761 = vpop.f32.mrb[0].mxu0
  %v762 = vadd.f32 %v688, %v761
  %v763 = vpop.f32.mrb[0].mxu0
  %764 = vmatprep.mubr.f32.mxu0 0.0
  %765 = vmatmul.mubr.f32.gmra.mrb[0].mxu0 %v693
  %v766 = vpop.f32.mrb[0].mxu0
  %v767 = vadd.f32 %v688, %v766
  %v768 = vpop.f32.mrb[0].mxu0
  %769 = vdwg.mxu0
  %770 = vst [vmem:[%s5] sm:$0xff] %v762
  %771 = vst [vmem:[%s5 + $0x8] sm:$0xff] %v767
  // Predicated region
  $region22: #{resnet_forward.1} parent=0 // pred_check
    _
  $region23: #{resnet_forward.1} parent=0 // pred_check_branch
    %773 = sbr.rel (0) target = $region25
  $region24: #{resnet_forward.1} parent=0 // pred_region
    _
  $region25: #{resnet_forward.1} parent=0 // pred_fallthru
    _
  // Predicated region
  $region26: #{resnet_forward.1} parent=0 // pred_check
    _
  $region27: #{resnet_forward.1} parent=0 // pred_check_branch
    %775 = sbr.rel (0) target = $region29
  $region28: #{resnet_forward.1} parent=0 // pred_region
    _
  $region29: #{resnet_forward.1} parent=0 // pred_fallthru
    _

</llo_original>
